<compile_context>
chip_gen: v6e
topology: v6e:2x2x1
jax: 0.10.0
libtpu: 0.0.40
codegen_flags: <defaults>
</compile_context>

<pallas_src>
import functools

import jax
import jax.numpy as jnp
from jax.experimental import pallas as pl
from jax.experimental.pallas import tpu as pltpu

IN_FEATURES = 500
D_PAD = 512            # K zero-extended to a lane multiple inside the kernel
LANE = 128
SUBLANE = 8
MAX_TM = 2048          # batch tile cap; ~15 MiB VMEM worst case (fits 32 MiB scoped)


def _round_up(x, m):
    return (x + m - 1) // m * m


def _cdiv(a, b):
    return -(-a // b)


def linear_kernel(x_ref, w_ref, b_ref, o_ref, xp_ref):
    # x_ref : [tm, 500]    streamed x tile (ragged last tile handled by Pallas)
    # w_ref : [512, c_pad] resident, zero rows 500..511
    # b_ref : [1, c_pad]   resident
    # o_ref : [tm, c_pad]  lane-dense output tile
    # xp_ref: [tm, 512]    VMEM scratch = x zero-extended along K
    tm = xp_ref.shape[0]
    # Zero the 12 pad lanes every step (tiny VPU/store cost, NaN-safe even when
    # the batch grid axis is sharded across TensorCores).
    xp_ref[:, IN_FEATURES:] = jnp.zeros((tm, D_PAD - IN_FEATURES), xp_ref.dtype)
    xp_ref[:, :IN_FEATURES] = x_ref[...]
    acc = jnp.dot(xp_ref[...], w_ref[...], preferred_element_type=jnp.float32)
    o_ref[...] = (acc + b_ref[...]).astype(o_ref.dtype)


def prepare_params(weight, bias):
    """One-time static prep: PyTorch-layout [C, 500] weight / [C] bias ->
    MXU/lane-friendly [512, C_pad] weight and [1, C_pad] bias (zero-padded)."""
    C = weight.shape[0]
    c_pad = _round_up(C, LANE)
    w_pad = jnp.zeros((D_PAD, c_pad), weight.dtype).at[:IN_FEATURES, :C].set(weight.T)
    b_pad = jnp.zeros((1, c_pad), bias.dtype).at[0, :C].set(bias)
    return w_pad, b_pad


@functools.partial(jax.jit, static_argnames=("n_classes",))
def classifier_forward(x, w_pad, b_pad, n_classes):
    """x: [B, 500] f32; w_pad/b_pad from prepare_params; returns [B, n_classes]."""
    B, D = x.shape
    assert D == IN_FEATURES
    d_pad, c_pad = w_pad.shape

    # Balanced batch tiling, no wrapper-side padding of x (ragged last tile).
    # Prefer >= 2 grid steps when B allows so the "parallel" axis can use both
    # TensorCores on v7x; an extra step on single-core chips costs ~0.35us.
    if B <= SUBLANE:
        tm = B                       # block equals the full batch dim
    else:
        n_tiles = max(_cdiv(B, MAX_TM), 2)
        tm = _round_up(_cdiv(B, n_tiles), SUBLANE)
    grid_m = _cdiv(B, tm)

    out = pl.pallas_call(
        linear_kernel,
        out_shape=jax.ShapeDtypeStruct((B, c_pad), x.dtype),
        grid_spec=pltpu.PrefetchScalarGridSpec(
            num_scalar_prefetch=0,
            grid=(grid_m,),
            in_specs=[
                pl.BlockSpec((tm, IN_FEATURES), lambda i: (i, 0)),  # streamed x tiles
                pl.BlockSpec((d_pad, c_pad), lambda i: (0, 0)),     # resident weight
                pl.BlockSpec((1, c_pad), lambda i: (0, 0)),         # resident bias
            ],
            out_specs=pl.BlockSpec((tm, c_pad), lambda i: (i, 0)),
            scratch_shapes=[pltpu.VMEM((tm, d_pad), x.dtype)],      # K-extended x
        ),
        compiler_params=pltpu.CompilerParams(
            dimension_semantics=("parallel",),   # batch axis -> megacore sharding
        ),
        cost_estimate=pl.CostEstimate(
            flops=2 * B * d_pad * c_pad,
            transcendentals=0,
            bytes_accessed=4 * (B * IN_FEATURES + d_pad * c_pad + B * c_pad),
        ),
    )(x, w_pad, b_pad)

    return out[:, :n_classes]


def init_params(key, n_classes):
    """Deterministic init matching the module's __init__ semantics."""
    kw, kb = jax.random.split(key)
    # kaiming_normal_: std = gain/sqrt(fan_in), gain=sqrt(2), fan_in=500
    std = (2.0 / IN_FEATURES) ** 0.5
    weight = std * jax.random.normal(kw, (n_classes, IN_FEATURES), jnp.float32)
    # nn.Linear default bias init: U(-1/sqrt(fan_in), 1/sqrt(fan_in))
    bound = 1.0 / (IN_FEATURES ** 0.5)
    bias = jax.random.uniform(
        kb, (n_classes,), jnp.float32, minval=-bound, maxval=bound
    )
    return weight, bias


if __name__ == "__main__":
    key = jax.random.PRNGKey(0)
    k_x, k_p = jax.random.split(key)

    batch = 8
    n_classes = 10

    x = jax.random.normal(k_x, (batch, IN_FEATURES), jnp.float32)
    weight, bias = init_params(k_p, n_classes)

    # Static, one-time parameter layout prep (transpose + pad).
    w_pad, b_pad = prepare_params(weight, bias)

    out = classifier_forward(x, w_pad, b_pad, n_classes)
    out = jax.block_until_ready(out)

    # Sanity check against plain JAX reference (PyTorch semantics: x @ W.T + b).
    ref = x @ weight.T + bias
    assert out.shape == (batch, n_classes)
    assert jnp.allclose(out, ref, atol=1e-4, rtol=1e-4)

    print("KERNEL_OK")
</pallas_src>

<mosaic_0001>
module attributes {stable_mosaic.version = 11 : i64} {
  func.func @linear_kernel(%arg0: i32, %arg1: memref<8x500xf32, #tpu.memory_space<vmem>>, %arg2: memref<512x128xf32, #tpu.memory_space<vmem>>, %arg3: memref<1x128xf32, #tpu.memory_space<vmem>>, %arg4: memref<8x128xf32, #tpu.memory_space<vmem>>, %arg5: memref<8x512xf32, #tpu.memory_space<vmem>>) attributes {dimension_semantics = [#tpu.dimension_semantics<parallel>], iteration_bounds = array<i64: 1>, scalar_prefetch = 0 : i64, scratch_operands = 1 : i64, tpu.core_type = #tpu.core_type<tc>, window_params = [{transform_indices = @transform_0, window_bounds = array<i64: 8, 500>}, {pipeline_mode = #tpu.pipeline_mode<synchronous>, transform_indices = @transform_1, window_bounds = array<i64: 512, 128>}, {pipeline_mode = #tpu.pipeline_mode<synchronous>, transform_indices = @transform_2, window_bounds = array<i64: 1, 128>}, {transform_indices = @transform_3, window_bounds = array<i64: 8, 128>}]} {
    %cst = arith.constant 0.000000e+00 : f32
    %0 = vector.broadcast %cst : f32 to vector<8x12xf32>
    %c0 = arith.constant 0 : index
    %c500 = arith.constant 500 : index
    %1 = vector.load %arg5[%c0, %c500] : memref<8x512xf32, #tpu.memory_space<vmem>>, vector<8x12xf32>
    tpu.vector_store %arg5[%c0, %c500], %0 {strides = array<i32>} : memref<8x512xf32, #tpu.memory_space<vmem>>, vector<8x12xf32>,
    %c0_0 = arith.constant 0 : index
    %c0_1 = arith.constant 0 : index
    %2 = vector.load %arg1[%c0_0, %c0_1] : memref<8x500xf32, #tpu.memory_space<vmem>>, vector<8x500xf32>
    %c0_2 = arith.constant 0 : index
    %c0_3 = arith.constant 0 : index
    %3 = vector.load %arg5[%c0_2, %c0_3] : memref<8x512xf32, #tpu.memory_space<vmem>>, vector<8x500xf32>
    tpu.vector_store %arg5[%c0_2, %c0_3], %2 {strides = array<i32>} : memref<8x512xf32, #tpu.memory_space<vmem>>, vector<8x500xf32>,
    %c0_4 = arith.constant 0 : index
    %c0_5 = arith.constant 0 : index
    %4 = vector.load %arg5[%c0_4, %c0_5] : memref<8x512xf32, #tpu.memory_space<vmem>>, vector<8x512xf32>
    %c0_6 = arith.constant 0 : index
    %c0_7 = arith.constant 0 : index
    %5 = vector.load %arg2[%c0_6, %c0_7] : memref<512x128xf32, #tpu.memory_space<vmem>>, vector<512x128xf32>
    %cst_8 = arith.constant dense<0.000000e+00> : vector<8x128xf32>
    %6 = tpu.matmul %4, %5, %cst_8 {dimension_numbers = #tpu.dot_dimension_numbers<[1], [0], [0], [1], [0, 0, 1, 1], [], []>} : vector<8x512xf32>, vector<512x128xf32>, vector<8x128xf32> -> vector<8x128xf32>
    %c0_9 = arith.constant 0 : index
    %c0_10 = arith.constant 0 : index
    %7 = vector.load %arg3[%c0_9, %c0_10] : memref<1x128xf32, #tpu.memory_space<vmem>>, vector<1x128xf32>
    %8 = vector.broadcast %7 : vector<1x128xf32> to vector<8x128xf32>
    %9 = arith.addf %6, %8 : vector<8x128xf32>
    %c0_11 = arith.constant 0 : index
    %c0_12 = arith.constant 0 : index
    %10 = vector.load %arg4[%c0_11, %c0_12] : memref<8x128xf32, #tpu.memory_space<vmem>>, vector<8x128xf32>
    tpu.vector_store %arg4[%c0_11, %c0_12], %9 {strides = array<i32>} : memref<8x128xf32, #tpu.memory_space<vmem>>, vector<8x128xf32>,
    return
  }
  func.func @transform_0(%arg0: i32) -> (i32, i32) {
    %c0_i32 = arith.constant 0 : i32
    %c0_i32_0 = arith.constant 0 : i32
    return %arg0, %c0_i32 : i32, i32
  }
  func.func @transform_1(%arg0: i32) -> (i32, i32) {
    %c0_i32 = arith.constant 0 : i32
    %c0_i32_0 = arith.constant 0 : i32
    %c0_i32_1 = arith.constant 0 : i32
    return %c0_i32, %c0_i32_0 : i32, i32
  }
  func.func @transform_2(%arg0: i32) -> (i32, i32) {
    %c0_i32 = arith.constant 0 : i32
    %c0_i32_0 = arith.constant 0 : i32
    %c0_i32_1 = arith.constant 0 : i32
    return %c0_i32, %c0_i32_0 : i32, i32
  }
  func.func @transform_3(%arg0: i32) -> (i32, i32) {
    %c0_i32 = arith.constant 0 : i32
    %c0_i32_0 = arith.constant 0 : i32
    return %arg0, %c0_i32 : i32, i32
  }
}

</mosaic_0001>

<llo_original>
// kernel: classifier_forward.1
$region0: #{classifier_forward.1}
  #allocation0 [shape = 'u32[]', space=smem, size = 0x4, offset = 0x4, fixed_abs, tag = 'smem constant byte address 0x4 - core index']
  #allocation1 [shape = 'u32[144,128]{1,0:T(1,128)}', space=vmem, size = 0x12000, scoped, tag = 'internal scratch']
  #allocation2 [shape = 'f32[8,512]{1,0:T(8,128)}', space=vmem, size = 0x4000, scoped, tag = 'scratch operand']
  %s0 = inlined_call_operand.hbm [shape: f32[8,500], index: 0, kind: input, shape index: {}]
  %s1 = inlined_call_operand.hbm [shape: f32[512,128], index: 1, kind: input, shape index: {}]
  %s2 = inlined_call_operand.vmem [shape: f32[1,128], index: 2, kind: input, shape index: {}]
  %s3 = inlined_call_operand.hbm [shape: f32[8,128], index: 3, kind: output, shape index: {}]
  %s4 = sld [smem:[#allocation0]]
  $region30: #{classifier_forward.1} parent=0
    _
  %s6 = ssub.s32 1, %s4
  %s7 = scalar_select 0, %s6, %s4
  $region1: #{classifier_forward.1} parent=0
    #allocation3 [shape = 'u8[16384]{0}', space=vmem, size = 0x4000, scoped, tag = 'input window, operand 0, single buffered']
    #allocation4 [shape = 's32[1]{0}', space=sflag, size = 0x4, scoped, tag = 'scoped memory for classifier_forward.1']
    #allocation5 [shape = 's32[1]{0}', space=sflag, size = 0x4, scoped, tag = 'scoped memory for classifier_forward.1']
    #allocation6 [shape = 'u8[262144]{0}', space=vmem, size = 0x40000, scoped, tag = 'input window, operand 1, single buffered']
    #allocation7 [shape = 's32[1]{0}', space=sflag, size = 0x4, scoped, tag = 'scoped memory for classifier_forward.1']
    #allocation8 [shape = 'u8[4096]{0}', space=vmem, size = 0x1000, scoped, tag = 'output window, operand 0, single buffered']
    %8 = vsyncpa [#allocation4], 0
    %9 = vsyncpa [#allocation7], 0
    %10 = vsyncpa [#allocation5], 0
    // Predicated region
    $region2: #{classifier_forward.1} parent=1 // pred_check
      _
    $region3: #{classifier_forward.1} parent=1 // pred_check_branch
      %12 = sbr.rel (0) target = $region5
    $region4: #{classifier_forward.1} parent=1 // pred_region
      %s14 = ssub.s32 512, 512
      %15 = vsyncadd [#allocation4], %s14
      %s17 = sshll.u32 [#allocation3], 4
      %s18 = int_to_ptr.vmem [resolvable:$true] %s17
      %20 = dma.hbm_to_vmem [thread:$0]  %s0, 512, %s18, [#allocation4]
    $region5: #{classifier_forward.1} parent=1 // pred_fallthru
      _
    // Predicated region
    $region6: #{classifier_forward.1} parent=1 // pred_check
      _
    $region7: #{classifier_forward.1} parent=1 // pred_check_branch
      %22 = sbr.rel (0) target = $region9
    $region8: #{classifier_forward.1} parent=1 // pred_region
      %s24 = ssub.s32 8192, 8192
      %25 = vsyncadd [#allocation7], %s24
      %s26 = sshll.u32 [#allocation6], 4
      %s27 = int_to_ptr.vmem [resolvable:$true] %s26
      %32 = dma.hbm_to_vmem [thread:$0]  %s1, 8192, %s27, [#allocation7], 128, 128, 8
    $region9: #{classifier_forward.1} parent=1 // pred_fallthru
      _
    // Predicated region
    $region10: #{classifier_forward.1} parent=1 // pred_check
      _
    $region11: #{classifier_forward.1} parent=1 // pred_check_branch
      %34 = sbr.rel (0) target = $region13
    $region12: #{classifier_forward.1} parent=1 // pred_region
      _
    $region13: #{classifier_forward.1} parent=1 // pred_fallthru
      _
    // Predicated region
    $region14: #{classifier_forward.1} parent=1 // pred_check
      _
    $region15: #{classifier_forward.1} parent=1 // pred_check_branch
      %36 = sbr.rel (0) target = $region17
    $region16: #{classifier_forward.1} parent=1 // pred_region
      %37 = dma.done [#allocation4], 512
    $region17: #{classifier_forward.1} parent=1 // pred_fallthru
      _
    // Predicated region
    $region18: #{classifier_forward.1} parent=1 // pred_check
      _
    $region19: #{classifier_forward.1} parent=1 // pred_check_branch
      %39 = sbr.rel (0) target = $region21
    $region20: #{classifier_forward.1} parent=1 // pred_region
      %40 = dma.done [#allocation7], 8192
    $region21: #{classifier_forward.1} parent=1 // pred_fallthru
      _
    %vm41 = vcmask 1048480
    %42 = vst.msk [vmem:[#allocation2 + $0x18] sm:$0xff] %vm41, 0.0
    %v43 = vld [vmem:[#allocation3] sm:$0xff]
    %v44 = vld [vmem:[#allocation3 + $0x8] sm:$0xff]
    %v45 = vld [vmem:[#allocation3 + $0x10] sm:$0xff]
    %v46 = vld [vmem:[#allocation3 + $0x18] sm:$0xff]
    %47 = vst [vmem:[#allocation2] sm:$0xff] %v43
    %48 = vst [vmem:[#allocation2 + $0x8] sm:$0xff] %v44
    %49 = vst [vmem:[#allocation2 + $0x10] sm:$0xff] %v45
    %vm50 = vcmask 949248
    %51 = vst.msk [vmem:[#allocation2 + $0x18] sm:$0xff] %vm50, %v46
    %v52 = vld [vmem:[#allocation2] sm:$0xff]
    %v53 = vld [vmem:[#allocation2 + $0x8] sm:$0xff]
    %v54 = vld [vmem:[#allocation2 + $0x10] sm:$0xff]
    %v55 = vld [vmem:[#allocation2 + $0x18] sm:$0xff]
    %v56 = vld [vmem:[#allocation6] sm:$0xff]
    %v57 = vld [vmem:[#allocation6 + $0x8] sm:$0xff]
    %v58 = vld [vmem:[#allocation6 + $0x10] sm:$0xff]
    %v59 = vld [vmem:[#allocation6 + $0x18] sm:$0xff]
    %v60 = vld [vmem:[#allocation6 + $0x20] sm:$0xff]
    %v61 = vld [vmem:[#allocation6 + $0x28] sm:$0xff]
    %v62 = vld [vmem:[#allocation6 + $0x30] sm:$0xff]
    %v63 = vld [vmem:[#allocation6 + $0x38] sm:$0xff]
    %v64 = vld [vmem:[#allocation6 + $0x40] sm:$0xff]
    %v65 = vld [vmem:[#allocation6 + $0x48] sm:$0xff]
    %v66 = vld [vmem:[#allocation6 + $0x50] sm:$0xff]
    %v67 = vld [vmem:[#allocation6 + $0x58] sm:$0xff]
    %v68 = vld [vmem:[#allocation6 + $0x60] sm:$0xff]
    %v69 = vld [vmem:[#allocation6 + $0x68] sm:$0xff]
    %v70 = vld [vmem:[#allocation6 + $0x70] sm:$0xff]
    %v71 = vld [vmem:[#allocation6 + $0x78] sm:$0xff]
    %v72 = vld [vmem:[#allocation6 + $0x80] sm:$0xff]
    %v73 = vld [vmem:[#allocation6 + $0x88] sm:$0xff]
    %v74 = vld [vmem:[#allocation6 + $0x90] sm:$0xff]
    %v75 = vld [vmem:[#allocation6 + $0x98] sm:$0xff]
    %v76 = vld [vmem:[#allocation6 + $0xa0] sm:$0xff]
    %v77 = vld [vmem:[#allocation6 + $0xa8] sm:$0xff]
    %v78 = vld [vmem:[#allocation6 + $0xb0] sm:$0xff]
    %v79 = vld [vmem:[#allocation6 + $0xb8] sm:$0xff]
    %v80 = vld [vmem:[#allocation6 + $0xc0] sm:$0xff]
    %v81 = vld [vmem:[#allocation6 + $0xc8] sm:$0xff]
    %v82 = vld [vmem:[#allocation6 + $0xd0] sm:$0xff]
    %v83 = vld [vmem:[#allocation6 + $0xd8] sm:$0xff]
    %v84 = vld [vmem:[#allocation6 + $0xe0] sm:$0xff]
    %v85 = vld [vmem:[#allocation6 + $0xe8] sm:$0xff]
    %v86 = vld [vmem:[#allocation6 + $0xf0] sm:$0xff]
    %v87 = vld [vmem:[#allocation6 + $0xf8] sm:$0xff]
    %v88 = vld [vmem:[#allocation6 + $0x100] sm:$0xff]
    %v89 = vld [vmem:[#allocation6 + $0x108] sm:$0xff]
    %v90 = vld [vmem:[#allocation6 + $0x110] sm:$0xff]
    %v91 = vld [vmem:[#allocation6 + $0x118] sm:$0xff]
    %v92 = vld [vmem:[#allocation6 + $0x120] sm:$0xff]
    %v93 = vld [vmem:[#allocation6 + $0x128] sm:$0xff]
    %v94 = vld [vmem:[#allocation6 + $0x130] sm:$0xff]
    %v95 = vld [vmem:[#allocation6 + $0x138] sm:$0xff]
    %v96 = vld [vmem:[#allocation6 + $0x140] sm:$0xff]
    %v97 = vld [vmem:[#allocation6 + $0x148] sm:$0xff]
    %v98 = vld [vmem:[#allocation6 + $0x150] sm:$0xff]
    %v99 = vld [vmem:[#allocation6 + $0x158] sm:$0xff]
    %v100 = vld [vmem:[#allocation6 + $0x160] sm:$0xff]
    %v101 = vld [vmem:[#allocation6 + $0x168] sm:$0xff]
    %v102 = vld [vmem:[#allocation6 + $0x170] sm:$0xff]
    %v103 = vld [vmem:[#allocation6 + $0x178] sm:$0xff]
    %v104 = vld [vmem:[#allocation6 + $0x180] sm:$0xff]
    %v105 = vld [vmem:[#allocation6 + $0x188] sm:$0xff]
    %v106 = vld [vmem:[#allocation6 + $0x190] sm:$0xff]
    %v107 = vld [vmem:[#allocation6 + $0x198] sm:$0xff]
    %v108 = vld [vmem:[#allocation6 + $0x1a0] sm:$0xff]
    %v109 = vld [vmem:[#allocation6 + $0x1a8] sm:$0xff]
    %v110 = vld [vmem:[#allocation6 + $0x1b0] sm:$0xff]
    %v111 = vld [vmem:[#allocation6 + $0x1b8] sm:$0xff]
    %v112 = vld [vmem:[#allocation6 + $0x1c0] sm:$0xff]
    %v113 = vld [vmem:[#allocation6 + $0x1c8] sm:$0xff]
    %v114 = vld [vmem:[#allocation6 + $0x1d0] sm:$0xff]
    %v115 = vld [vmem:[#allocation6 + $0x1d8] sm:$0xff]
    %v116 = vld [vmem:[#allocation6 + $0x1e0] sm:$0xff]
    %v117 = vld [vmem:[#allocation6 + $0x1e8] sm:$0xff]
    %v118 = vld [vmem:[#allocation6 + $0x1f0] sm:$0xff]
    %v119 = vld [vmem:[#allocation6 + $0x1f8] sm:$0xff]
    %v120 = vld [vmem:[%s2] sm:$0x1]
    %v122 = vlaneseq
    %v123 = vshrl.u32 %v122, 7
    %v124 = vsub.s32 0, %v123
    %v125 = vrot.slane %v120, %v124
    %127 = vmatprep.subr.mxu0 0.0
    %128 = vmatpush1.msra.mxu0 %v71
    %129 = vmatprep.subr.mxu0 0.0
    %130 = vmatpush1.msra.mxu0 %v70
    %131 = vmatprep.subr.mxu0 0.0
    %132 = vmatpush1.msra.mxu0 %v69
    %133 = vmatprep.subr.mxu0 0.0
    %134 = vmatpush1.msra.mxu0 %v68
    %135 = vmatprep.subr.mxu0 0.0
    %136 = vmatpush1.msra.mxu0 %v67
    %137 = vmatprep.subr.mxu0 0.0
    %138 = vmatpush1.msra.mxu0 %v66
    %139 = vmatprep.subr.mxu0 0.0
    %140 = vmatpush1.msra.mxu0 %v65
    %141 = vmatprep.subr.mxu0 0.0
    %142 = vmatpush1.msra.mxu0 %v64
    %143 = vmatprep.subr.mxu0 0.0
    %144 = vmatpush1.msra.mxu0 %v63
    %145 = vmatprep.subr.mxu0 0.0
    %146 = vmatpush1.msra.mxu0 %v62
    %147 = vmatprep.subr.mxu0 0.0
    %148 = vmatpush1.msra.mxu0 %v61
    %149 = vmatprep.subr.mxu0 0.0
    %150 = vmatpush1.msra.mxu0 %v60
    %151 = vmatprep.subr.mxu0 0.0
    %152 = vmatpush1.msra.mxu0 %v59
    %153 = vmatprep.subr.mxu0 0.0
    %154 = vmatpush1.msra.mxu0 %v58
    %155 = vmatprep.subr.mxu0 0.0
    %156 = vmatpush1.msra.mxu0 %v57
    %157 = vmatprep.subr.mxu0 0.0
    %158 = vmatpush1.msra.mxu0 %v56
    %159 = vmatprep.subr.mxu0 0.0
    %160 = vmatpush2.msra.mxu0 %v87
    %161 = vmatprep.subr.mxu0 0.0
    %162 = vmatpush2.msra.mxu0 %v86
    %163 = vmatprep.subr.mxu0 0.0
    %164 = vmatpush2.msra.mxu0 %v85
    %165 = vmatprep.subr.mxu0 0.0
    %166 = vmatpush2.msra.mxu0 %v84
    %167 = vmatprep.subr.mxu0 0.0
    %168 = vmatpush2.msra.mxu0 %v83
    %169 = vmatprep.subr.mxu0 0.0
    %170 = vmatpush2.msra.mxu0 %v82
    %171 = vmatprep.subr.mxu0 0.0
    %172 = vmatpush2.msra.mxu0 %v81
    %173 = vmatprep.subr.mxu0 0.0
    %174 = vmatpush2.msra.mxu0 %v80
    %175 = vmatprep.subr.mxu0 0.0
    %176 = vmatpush2.msra.mxu0 %v79
    %177 = vmatprep.subr.mxu0 0.0
    %178 = vmatpush2.msra.mxu0 %v78
    %179 = vmatprep.subr.mxu0 0.0
    %180 = vmatpush2.msra.mxu0 %v77
    %181 = vmatprep.subr.mxu0 0.0
    %182 = vmatpush2.msra.mxu0 %v76
    %183 = vmatprep.subr.mxu0 0.0
    %184 = vmatpush2.msra.mxu0 %v75
    %185 = vmatprep.subr.mxu0 0.0
    %186 = vmatpush2.msra.mxu0 %v74
    %187 = vmatprep.subr.mxu0 0.0
    %188 = vmatpush2.msra.mxu0 %v73
    %189 = vmatprep.subr.mxu0 0.0
    %190 = vmatpush2.msra.mxu0 %v72
    %191 = vmatprep.mubr.f32.mxu0 %v53
    %192 = vmatmul.mubr.f32.gmra.mxu0 %v52
    %v193 = vpop.f32.mrf.mxu0
    %v194 = vadd.f32 %v125, %v193
    %v195 = vpop.f32.mrf.mxu0
    %196 = vdwg.mxu0
    %197 = vmatprep.subr.mxu0 0.0
    %198 = vmatpush1.msra.mxu0 %v103
    %199 = vmatprep.subr.mxu0 0.0
    %200 = vmatpush1.msra.mxu0 %v102
    %201 = vmatprep.subr.mxu0 0.0
    %202 = vmatpush1.msra.mxu0 %v101
    %203 = vmatprep.subr.mxu0 0.0
    %204 = vmatpush1.msra.mxu0 %v100
    %205 = vmatprep.subr.mxu0 0.0
    %206 = vmatpush1.msra.mxu0 %v99
    %207 = vmatprep.subr.mxu0 0.0
    %208 = vmatpush1.msra.mxu0 %v98
    %209 = vmatprep.subr.mxu0 0.0
    %210 = vmatpush1.msra.mxu0 %v97
    %211 = vmatprep.subr.mxu0 0.0
    %212 = vmatpush1.msra.mxu0 %v96
    %213 = vmatprep.subr.mxu0 0.0
    %214 = vmatpush1.msra.mxu0 %v95
    %215 = vmatprep.subr.mxu0 0.0
    %216 = vmatpush1.msra.mxu0 %v94
    %217 = vmatprep.subr.mxu0 0.0
    %218 = vmatpush1.msra.mxu0 %v93
    %219 = vmatprep.subr.mxu0 0.0
    %220 = vmatpush1.msra.mxu0 %v92
    %221 = vmatprep.subr.mxu0 0.0
    %222 = vmatpush1.msra.mxu0 %v91
    %223 = vmatprep.subr.mxu0 0.0
    %224 = vmatpush1.msra.mxu0 %v90
    %225 = vmatprep.subr.mxu0 0.0
    %226 = vmatpush1.msra.mxu0 %v89
    %227 = vmatprep.subr.mxu0 0.0
    %228 = vmatpush1.msra.mxu0 %v88
    %229 = vmatprep.subr.mxu0 0.0
    %230 = vmatpush2.msra.mxu0 %v119
    %231 = vmatprep.subr.mxu0 0.0
    %232 = vmatpush2.msra.mxu0 %v118
    %233 = vmatprep.subr.mxu0 0.0
    %234 = vmatpush2.msra.mxu0 %v117
    %235 = vmatprep.subr.mxu0 0.0
    %236 = vmatpush2.msra.mxu0 %v116
    %237 = vmatprep.subr.mxu0 0.0
    %238 = vmatpush2.msra.mxu0 %v115
    %239 = vmatprep.subr.mxu0 0.0
    %240 = vmatpush2.msra.mxu0 %v114
    %241 = vmatprep.subr.mxu0 0.0
    %242 = vmatpush2.msra.mxu0 %v113
    %243 = vmatprep.subr.mxu0 0.0
    %244 = vmatpush2.msra.mxu0 %v112
    %245 = vmatprep.subr.mxu0 0.0
    %246 = vmatpush2.msra.mxu0 %v111
    %247 = vmatprep.subr.mxu0 0.0
    %248 = vmatpush2.msra.mxu0 %v110
    %249 = vmatprep.subr.mxu0 0.0
    %250 = vmatpush2.msra.mxu0 %v109
    %251 = vmatprep.subr.mxu0 0.0
    %252 = vmatpush2.msra.mxu0 %v108
    %253 = vmatprep.subr.mxu0 0.0
    %254 = vmatpush2.msra.mxu0 %v107
    %255 = vmatprep.subr.mxu0 0.0
    %256 = vmatpush2.msra.mxu0 %v106
    %257 = vmatprep.subr.mxu0 0.0
    %258 = vmatpush2.msra.mxu0 %v105
    %259 = vmatprep.subr.mxu0 0.0
    %260 = vmatpush2.msra.mxu0 %v104
    %261 = vmatprep.mubr.f32.mxu0 %v55
    %262 = vmatmul.mubr.f32.gmra.mxu0 %v54
    %v263 = vpop.f32.mrf.mxu0
    %v264 = vadd.f32 %v194, %v263
    %v265 = vpop.f32.mrf.mxu0
    %266 = vdwg.mxu0
    %267 = vst [vmem:[#allocation8] sm:$0xff] %v264
    // Predicated region
    $region22: #{classifier_forward.1} parent=1 // pred_check
      _
    $region23: #{classifier_forward.1} parent=1 // pred_check_branch
      %269 = sbr.rel (0) target = $region25
    $region24: #{classifier_forward.1} parent=1 // pred_region
      %s271 = ssub.s32 128, 128
      %272 = vsyncadd [#allocation5], %s271
      %s274 = sshll.u32 [#allocation8], 4
      %s275 = int_to_ptr.vmem [resolvable:$true] %s274
      %277 = dma.vmem_to_hbm [thread:$0]  %s275, 128, %s3, [#allocation5]
    $region25: #{classifier_forward.1} parent=1 // pred_fallthru
      _
    // Predicated region
    $region26: #{classifier_forward.1} parent=1 // pred_check
      _
    $region27: #{classifier_forward.1} parent=1 // pred_check_branch
      %279 = sbr.rel (0) target = $region29
    $region28: #{classifier_forward.1} parent=1 // pred_region
      %280 = dma.done [#allocation5], 128
    $region29: #{classifier_forward.1} parent=1 // pred_fallthru
      _
    %281 = vsyncpa [#allocation4], 1
    %282 = vsyncpa [#allocation7], 1
    %283 = vsyncpa [#allocation5], 1

</llo_original>
